<compile_context>
chip_gen: v7x
topology: tpu7x:2x2x1
jax: 0.10.0
libtpu: 0.0.40
codegen_flags: <defaults>
</compile_context>

<pallas_src>
import functools

import jax
import jax.numpy as jnp
from jax import lax
from jax.experimental import pallas as pl
from jax.experimental.pallas import tpu as pltpu


def _round_up(x, m):
    return ((x + m - 1) // m) * m


def _cluster_kernel(mu_in_ref, data_ref, *refs, gama, n_tiles, n_h, mxu_dtype,
                    emit_r, approx_recip):
    """One (iteration, data-tile) grid step of soft cosine k-means.

    refs = (mu_ref, [r_ref], munorm_ref, acc_ref)
    Streamed data tile layout (mxu_dtype): [x_norm (n_h) | 1/||x|| | ||x||];
    all three parts are zero for N-padding rows, so padding contributes nothing.
    """
    if emit_r:
        mu_ref, r_ref, munorm_ref, acc_ref = refs
    else:
        mu_ref, munorm_ref, acc_ref = refs
        r_ref = None

    it = pl.program_id(0)   # k-means iteration (sequential, carries mu)
    nt = pl.program_id(1)   # data tile within the iteration (sequential, carries acc)
    eps = 1e-8

    @pl.when((it == 0) & (nt == 0))
    def _init_mu():
        mu_ref[...] = mu_in_ref[...]

    @pl.when(nt == 0)
    def _start_iteration():
        # mu normalisation hoisted to once-per-iteration (not once-per-tile):
        # mu * rsqrt(max(||mu||^2, eps^2)) == mu / max(||mu||, eps)  (EUP rsqrt).
        mu = mu_ref[...]
        m_inv = lax.rsqrt(jnp.maximum(jnp.sum(mu * mu, axis=1, keepdims=True),
                                      eps * eps))
        munorm_ref[...] = jnp.zeros_like(munorm_ref)     # 2 trailing zero columns
        munorm_ref[:, :n_h] = mu * m_inv
        acc_ref[...] = jnp.zeros_like(acc_ref)

    aug = data_ref[...]                                   # (TN, n_h + 2), mxu_dtype
    mu_nt = munorm_ref[...].astype(mxu_dtype)             # (K, n_h + 2), tiny cast

    # dist = x_norm @ mu_norm^T; the contraction also covers the 2 aux columns of
    # the tile against the 2 zero columns of munorm -> no per-tile slicing/masking.
    dist = lax.dot_general(aug, mu_nt, (((1,), (1,)), ((), ())),
                           preferred_element_type=jnp.float32)   # (TN, K)
    logits = dist * jnp.float32(1.0 / gama)
    if gama < (1.0 / 60.0):
        # cosine logits are bounded by ~1/gama; only stabilise when exp could overflow
        logits = logits - jnp.max(logits, axis=1, keepdims=True)
    e = jnp.exp(logits)
    inv_den = pl.reciprocal(jnp.sum(e, axis=1, keepdims=True), approx=approx_recip)
    r = e * inv_den                                       # (TN, K); rows sum to 1

    if emit_r:
        r_ref[...] = r.astype(r_ref.dtype)                # only in the final-iteration call

    # Exact raw-data statistics from the normalised stream:
    #   (r * ||x||)^T @ [x_norm | 1/||x|| | ||x||] = [r^T x | sum_i r | unused]
    s = aug[:, n_h + 1:n_h + 2].astype(jnp.float32)       # (TN, 1) row scale
    rs = (r * s).astype(mxu_dtype)
    acc_ref[...] += lax.dot_general(rs, aug, (((0,), (0,)), ((), ())),
                                    preferred_element_type=jnp.float32)  # (K, n_h+2)

    @pl.when(nt == n_tiles - 1)
    def _finish_iteration():
        acc = acc_ref[...]
        cluster_mean = acc[:, :n_h]
        cluster_r = acc[:, n_h:n_h + 1]
        # Straight divide matches the PyTorch reference (inf/NaN on empty clusters).
        mu_ref[...] = cluster_mean / cluster_r


def _default_vmem():
    """Per-generation VMEM budget / limit: ~70/96 MiB on 128 MiB parts (v5e/v6e),
    ~35/48 MiB on v7x's 64 MiB VMEM."""
    cap = 64 * 1024 * 1024
    try:
        info = pltpu.get_tpu_info()
        cap = int(getattr(info, "vmem_capacity_bytes", cap) or cap)
    except Exception:
        pass
    return int(cap * 0.55), int(cap * 0.75)


def _pick_block_n(n, n_h, n_aug, k, in_itemsize, r_itemsize, budget_bytes):
    """Largest row tile whose VMEM working set (with lane padding) fits the budget."""
    lanes_in = _round_up(n_aug, 128)
    lanes_k = _round_up(k, 128)
    per_row = (2 * lanes_in * in_itemsize      # double-buffered streamed data block
               + 2 * lanes_k * r_itemsize      # double-buffered r output block (final call)
               + 5 * lanes_k * 4               # dist/logits/e/r/rs f32 temporaries
               + lanes_in * 4)                 # f32 working copies of the tile
    fixed = (4 * max(k, 8) * _round_up(n_h, 128) * 4      # mu in/out buffers
             + 2 * max(k, 8) * lanes_in * 4)              # munorm + acc scratch
    cap = _round_up(max(n, 16), 16)
    if fixed + cap * per_row <= budget_bytes:
        return cap                              # fully resident (single tile)
    for tn in (16384, 8192, 4096, 2048, 1024, 512, 256, 128, 64, 32, 16):
        if tn <= cap and fixed + tn * per_row <= budget_bytes:
            return tn
    return 16


def clusterator_forward(embeds, mu_init, gama, num_iter=11, *,
                        mxu_dtype=jnp.bfloat16, r_dtype=jnp.float32,
                        block_n=None, vmem_budget_bytes=None,
                        vmem_limit_bytes=None):
    n, n_h = embeds.shape
    k, n_h2 = mu_init.shape
    assert n_h == n_h2
    num_iter = int(num_iter)
    assert num_iter >= 1

    eps = 1e-8
    n_aug = n_h + 2
    mxu_dtype = jnp.dtype(mxu_dtype)
    r_dtype = jnp.dtype(r_dtype)

    budget, limit = _default_vmem()
    if vmem_budget_bytes is not None:
        budget = int(vmem_budget_bytes)
    if vmem_limit_bytes is None:
        vmem_limit_bytes = limit

    if block_n is None:
        block_n = _pick_block_n(n, n_h, n_aug, k, mxu_dtype.itemsize,
                                r_dtype.itemsize, budget)
    block_n = _round_up(min(block_n, _round_up(n, 16)), 16)
    n_pad = _round_up(n, block_n)
    n_tiles = n_pad // block_n

    # Iteration-invariant normalisation hoisted out of the kernel (once instead of
    # num_iter times per row).  Streaming 1/||x|| and ||x|| lets the in-kernel stats
    # matmul recover exact raw-data cluster means/counts from the normalised stream.
    x = embeds.astype(jnp.float32)
    scale = jnp.maximum(jnp.sqrt(jnp.sum(x * x, axis=1, keepdims=True)), eps)
    x_norm = x / scale

    data_s = jnp.zeros((n_pad, n_aug), mxu_dtype)
    data_s = data_s.at[:n, :n_h].set(x_norm.astype(mxu_dtype))
    data_s = data_s.at[:n, n_h].set((1.0 / scale[:, 0]).astype(mxu_dtype))
    data_s = data_s.at[:n, n_h + 1].set(scale[:, 0].astype(mxu_dtype))

    mu0 = mu_init.astype(jnp.float32)

    approx_recip = mxu_dtype != jnp.dtype(jnp.float32)
    kern = functools.partial(_cluster_kernel, gama=float(gama), n_tiles=n_tiles,
                             n_h=n_h, mxu_dtype=mxu_dtype, approx_recip=approx_recip)

    mu_spec = pl.BlockSpec((k, n_h), lambda it, nt: (0, 0))           # resident / carried
    data_spec = pl.BlockSpec((block_n, n_aug), lambda it, nt: (nt, 0))  # streamed tiles
    scratch = [pltpu.VMEM((k, n_aug), jnp.float32),    # normalised mu (+2 zero cols)
               pltpu.VMEM((k, n_aug), jnp.float32)]    # [cluster_mean | cluster_r | .]
    cparams = pltpu.CompilerParams(
        dimension_semantics=("arbitrary", "arbitrary"),
        vmem_limit_bytes=int(vmem_limit_bytes))
    # TODO(synk): v7x dual-TensorCore split of the nt axis (per-core partial acc +
    # cross-core reduce) is not implemented; kernel runs on a single TC per call.

    mu = mu0
    if num_iter > 1:
        # Iterations 0 .. num_iter-2: only mu is produced; r is never written to HBM.
        mu = pl.pallas_call(
            functools.partial(kern, emit_r=False),
            out_shape=jax.ShapeDtypeStruct((k, n_h), jnp.float32),
            grid_spec=pltpu.PrefetchScalarGridSpec(
                num_scalar_prefetch=0,
                grid=(num_iter - 1, n_tiles),
                in_specs=[mu_spec, data_spec],
                out_specs=mu_spec,
                scratch_shapes=scratch),
            compiler_params=cparams,
        )(mu, data_s)

    # Final iteration: produces both the updated mu and r (single HBM write of r).
    mu_out, r_full = pl.pallas_call(
        functools.partial(kern, emit_r=True),
        out_shape=(jax.ShapeDtypeStruct((k, n_h), jnp.float32),
                   jax.ShapeDtypeStruct((n_pad, k), r_dtype)),
        grid_spec=pltpu.PrefetchScalarGridSpec(
            num_scalar_prefetch=0,
            grid=(1, n_tiles),
            in_specs=[mu_spec, data_spec],
            out_specs=(mu_spec,
                       pl.BlockSpec((block_n, k), lambda it, nt: (nt, 0))),
            scratch_shapes=scratch),
        compiler_params=cparams,
    )(mu, data_s)

    return mu_out, r_full[:n, :]


def _reference_forward(embeds, mu_init, gama, num_iter=11):
    """Pure-JAX reference mirroring the PyTorch forward exactly."""
    eps = 1e-8
    data = embeds
    data_abs = jnp.linalg.norm(data, axis=1, keepdims=True)
    data_norm = data / jnp.maximum(data_abs, eps)
    mu = mu_init
    r = None
    for _ in range(num_iter):
        mu_abs = jnp.linalg.norm(mu, axis=1, keepdims=True)
        mu_norm = mu / jnp.maximum(mu_abs, eps)
        dist = data_norm @ mu_norm.T
        r = jax.nn.softmax(dist / gama, axis=1)
        cluster_r = r.sum(axis=0)
        cluster_mean = r.T @ data
        mu = cluster_mean / cluster_r[:, None]
    return mu, r


if __name__ == "__main__":
    # Small synthetic problem: N=64 points, n_h=32 hidden, K=8 clusters.
    N, n_h, K = 64, 32, 8
    gama = 0.5

    key = jax.random.PRNGKey(0)
    k_embeds, k_init = jax.random.split(key)
    embeds = jax.random.normal(k_embeds, (N, n_h), dtype=jnp.float32)
    # torch.rand(K, n_h) -> uniform [0, 1)
    mu_init = jax.random.uniform(k_init, (K, n_h), dtype=jnp.float32)

    mu_ref, r_ref = _reference_forward(embeds, mu_init, gama, num_iter=11)

    # 1) exact path (f32 MXU operands, exact reciprocal), single resident tile
    mu, r = clusterator_forward(embeds, mu_init, gama, 11, mxu_dtype=jnp.float32)
    mu = jax.block_until_ready(mu)
    r = jax.block_until_ready(r)
    assert mu.shape == (K, n_h) and r.shape == (N, K)
    assert jnp.allclose(mu, mu_ref, atol=1e-3, rtol=1e-3)
    assert jnp.allclose(r, r_ref, atol=1e-3, rtol=1e-3)
    assert jnp.allclose(jnp.sum(r, axis=1), 1.0, atol=1e-3)

    # 2) exact path again, forcing the N-tiled streaming structure (2 tiles)
    mu_t, r_t = clusterator_forward(embeds, mu_init, gama, 11,
                                    mxu_dtype=jnp.float32, block_n=32)
    mu_t = jax.block_until_ready(mu_t)
    r_t = jax.block_until_ready(r_t)
    assert jnp.allclose(mu_t, mu_ref, atol=1e-3, rtol=1e-3)
    assert jnp.allclose(r_t, r_ref, atol=1e-3, rtol=1e-3)

    # 3) single-iteration edge case (final-iteration call only)
    mu1_ref, r1_ref = _reference_forward(embeds, mu_init, gama, num_iter=1)
    mu1, r1 = clusterator_forward(embeds, mu_init, gama, 1, mxu_dtype=jnp.float32)
    mu1 = jax.block_until_ready(mu1)
    r1 = jax.block_until_ready(r1)
    assert jnp.allclose(mu1, mu1_ref, atol=1e-3, rtol=1e-3)
    assert jnp.allclose(r1, r1_ref, atol=1e-3, rtol=1e-3)

    # 4) default fast path (bf16 streamed data + approx reciprocal): sanity checks
    mu_b, r_b = clusterator_forward(embeds, mu_init, gama, 11)
    mu_b = jax.block_until_ready(mu_b)
    r_b = jax.block_until_ready(r_b)
    assert mu_b.shape == (K, n_h) and r_b.shape == (N, K)
    assert bool(jnp.all(jnp.isfinite(mu_b))) and bool(jnp.all(jnp.isfinite(r_b)))
    assert jnp.allclose(jnp.sum(r_b, axis=1), 1.0, atol=5e-2)

    print("KERNEL_OK")
</pallas_src>

<mosaic_0001>
module attributes {stable_mosaic.version = 11 : i64} {
  func.func @_cluster_kernel(%arg0: i32, %arg1: i32, %arg2: memref<8x32xf32, #tpu.memory_space<vmem>>, %arg3: memref<64x34xf32, #tpu.memory_space<vmem>>, %arg4: memref<8x32xf32, #tpu.memory_space<vmem>>, %arg5: memref<8x34xf32, #tpu.memory_space<vmem>>, %arg6: memref<8x34xf32, #tpu.memory_space<vmem>>) attributes {dimension_semantics = [#tpu.dimension_semantics<arbitrary>, #tpu.dimension_semantics<arbitrary>], iteration_bounds = array<i64: 10, 1>, scalar_prefetch = 0 : i64, scratch_operands = 2 : i64, tpu.core_type = #tpu.core_type<tc>, window_params = [{pipeline_mode = #tpu.pipeline_mode<synchronous>, transform_indices = @transform_0, window_bounds = array<i64: 8, 32>}, {transform_indices = @transform_1, window_bounds = array<i64: 64, 34>}, {pipeline_mode = #tpu.pipeline_mode<synchronous>, transform_indices = @transform_2, window_bounds = array<i64: 8, 32>}]} {
    %c0_i32 = arith.constant 0 : i32
    %0 = arith.cmpi eq, %arg0, %c0_i32 : i32
    %c0_i32_0 = arith.constant 0 : i32
    %1 = arith.cmpi eq, %arg1, %c0_i32_0 : i32
    %2 = arith.andi %0, %1 : i1
    %3 = arith.extui %2 : i1 to i32
    %c0_i32_1 = arith.constant 0 : i32
    %4 = arith.cmpi ne, %3, %c0_i32_1 : i32
    scf.if %4 {
      %c0_16 = arith.constant 0 : index
      %c0_17 = arith.constant 0 : index
      %29 = vector.load %arg2[%c0_16, %c0_17] : memref<8x32xf32, #tpu.memory_space<vmem>>, vector<8x32xf32>
      %c0_18 = arith.constant 0 : index
      %c0_19 = arith.constant 0 : index
      %30 = vector.load %arg4[%c0_18, %c0_19] : memref<8x32xf32, #tpu.memory_space<vmem>>, vector<8x32xf32>
      tpu.vector_store %arg4[%c0_18, %c0_19], %29 {strides = array<i32>} : memref<8x32xf32, #tpu.memory_space<vmem>>, vector<8x32xf32>,
    } else {
    }
    %c0_i32_2 = arith.constant 0 : i32
    %5 = arith.cmpi eq, %arg1, %c0_i32_2 : i32
    %6 = arith.extui %5 : i1 to i32
    %c0_i32_3 = arith.constant 0 : i32
    %7 = arith.cmpi ne, %6, %c0_i32_3 : i32
    scf.if %7 {
      %c0_16 = arith.constant 0 : index
      %c0_17 = arith.constant 0 : index
      %29 = vector.load %arg4[%c0_16, %c0_17] : memref<8x32xf32, #tpu.memory_space<vmem>>, vector<8x32xf32>
      %30 = arith.mulf %29, %29 : vector<8x32xf32>
      %cst_18 = arith.constant dense<0.000000e+00> : vector<8xf32>
      %31 = vector.multi_reduction <add>, %30, %cst_18 [1] : vector<8x32xf32> to vector<8xf32>
      %32 = vector.shape_cast %31 : vector<8xf32> to vector<8x1xf32>
      %cst_19 = arith.constant 1.000000e-16 : f32
      %33 = vector.broadcast %cst_19 : f32 to vector<8x1xf32>
      %34 = arith.maximumf %32, %33 : vector<8x1xf32>
      %35 = math.rsqrt %34 : vector<8x1xf32>
      %cst_20 = arith.constant 0.000000e+00 : f32
      %36 = vector.broadcast %cst_20 : f32 to vector<8x34xf32>
      %c0_21 = arith.constant 0 : index
      %c0_22 = arith.constant 0 : index
      %37 = vector.load %arg5[%c0_21, %c0_22] : memref<8x34xf32, #tpu.memory_space<vmem>>, vector<8x34xf32>
      tpu.vector_store %arg5[%c0_21, %c0_22], %36 {strides = array<i32>} : memref<8x34xf32, #tpu.memory_space<vmem>>, vector<8x34xf32>,
      %38 = vector.broadcast %35 : vector<8x1xf32> to vector<8x32xf32>
      %39 = arith.mulf %29, %38 : vector<8x32xf32>
      %c0_23 = arith.constant 0 : index
      %c0_24 = arith.constant 0 : index
      %40 = vector.load %arg5[%c0_23, %c0_24] : memref<8x34xf32, #tpu.memory_space<vmem>>, vector<8x32xf32>
      tpu.vector_store %arg5[%c0_23, %c0_24], %39 {strides = array<i32>} : memref<8x34xf32, #tpu.memory_space<vmem>>, vector<8x32xf32>,
      %cst_25 = arith.constant 0.000000e+00 : f32
      %41 = vector.broadcast %cst_25 : f32 to vector<8x34xf32>
      %c0_26 = arith.constant 0 : index
      %c0_27 = arith.constant 0 : index
      %42 = vector.load %arg6[%c0_26, %c0_27] : memref<8x34xf32, #tpu.memory_space<vmem>>, vector<8x34xf32>
      tpu.vector_store %arg6[%c0_26, %c0_27], %41 {strides = array<i32>} : memref<8x34xf32, #tpu.memory_space<vmem>>, vector<8x34xf32>,
    } else {
    }
    %c0 = arith.constant 0 : index
    %c0_4 = arith.constant 0 : index
    %8 = vector.load %arg3[%c0, %c0_4] : memref<64x34xf32, #tpu.memory_space<vmem>>, vector<64x34xf32>
    %c0_5 = arith.constant 0 : index
    %c0_6 = arith.constant 0 : index
    %9 = vector.load %arg5[%c0_5, %c0_6] : memref<8x34xf32, #tpu.memory_space<vmem>>, vector<8x34xf32>
    %cst = arith.constant dense<0.000000e+00> : vector<64x8xf32>
    %10 = tpu.matmul %8, %9, %cst {dimension_numbers = #tpu.dot_dimension_numbers<[1], [1], [0], [0], [0, 0, 1, 0], [], []>} : vector<64x34xf32>, vector<8x34xf32>, vector<64x8xf32> -> vector<64x8xf32>
    %cst_7 = arith.constant 2.000000e+00 : f32
    %11 = vector.broadcast %cst_7 : f32 to vector<64x8xf32>
    %12 = arith.mulf %10, %11 : vector<64x8xf32>
    %13 = math.exp %12 : vector<64x8xf32>
    %cst_8 = arith.constant dense<0.000000e+00> : vector<64xf32>
    %14 = vector.multi_reduction <add>, %13, %cst_8 [1] : vector<64x8xf32> to vector<64xf32>
    %15 = vector.shape_cast %14 : vector<64xf32> to vector<64x1xf32>
    %16 = tpu.reciprocal %15 : vector<64x1xf32> -> vector<64x1xf32>
    %17 = vector.broadcast %16 : vector<64x1xf32> to vector<64x8xf32>
    %18 = arith.mulf %13, %17 : vector<64x8xf32>
    %19 = vector.extract_strided_slice %8 {offsets = [0, 33], sizes = [64, 1], strides = [1, 1]} : vector<64x34xf32> to vector<64x1xf32>
    %20 = vector.broadcast %19 : vector<64x1xf32> to vector<64x8xf32>
    %21 = arith.mulf %18, %20 : vector<64x8xf32>
    %c0_9 = arith.constant 0 : index
    %c0_10 = arith.constant 0 : index
    %22 = vector.load %arg6[%c0_9, %c0_10] : memref<8x34xf32, #tpu.memory_space<vmem>>, vector<8x34xf32>
    %cst_11 = arith.constant dense<0.000000e+00> : vector<8x34xf32>
    %23 = tpu.matmul %21, %8, %cst_11 {dimension_numbers = #tpu.dot_dimension_numbers<[0], [0], [1], [1], [0, 1, 1, 1], [], []>} : vector<64x8xf32>, vector<64x34xf32>, vector<8x34xf32> -> vector<8x34xf32>
    %24 = arith.addf %22, %23 : vector<8x34xf32>
    %c0_12 = arith.constant 0 : index
    %c0_13 = arith.constant 0 : index
    %25 = vector.load %arg6[%c0_12, %c0_13] : memref<8x34xf32, #tpu.memory_space<vmem>>, vector<8x34xf32>
    tpu.vector_store %arg6[%c0_12, %c0_13], %24 {strides = array<i32>} : memref<8x34xf32, #tpu.memory_space<vmem>>, vector<8x34xf32>,
    %c0_i32_14 = arith.constant 0 : i32
    %26 = arith.cmpi eq, %arg1, %c0_i32_14 : i32
    %27 = arith.extui %26 : i1 to i32
    %c0_i32_15 = arith.constant 0 : i32
    %28 = arith.cmpi ne, %27, %c0_i32_15 : i32
    scf.if %28 {
      %c0_16 = arith.constant 0 : index
      %c0_17 = arith.constant 0 : index
      %29 = vector.load %arg6[%c0_16, %c0_17] : memref<8x34xf32, #tpu.memory_space<vmem>>, vector<8x34xf32>
      %30 = vector.extract_strided_slice %29 {offsets = [0, 0], sizes = [8, 32], strides = [1, 1]} : vector<8x34xf32> to vector<8x32xf32>
      %31 = vector.extract_strided_slice %29 {offsets = [0, 32], sizes = [8, 1], strides = [1, 1]} : vector<8x34xf32> to vector<8x1xf32>
      %32 = vector.broadcast %31 : vector<8x1xf32> to vector<8x32xf32>
      %33 = arith.divf %30, %32 : vector<8x32xf32>
      %c0_18 = arith.constant 0 : index
      %c0_19 = arith.constant 0 : index
      %34 = vector.load %arg4[%c0_18, %c0_19] : memref<8x32xf32, #tpu.memory_space<vmem>>, vector<8x32xf32>
      tpu.vector_store %arg4[%c0_18, %c0_19], %33 {strides = array<i32>} : memref<8x32xf32, #tpu.memory_space<vmem>>, vector<8x32xf32>,
    } else {
    }
    return
  }
  func.func @transform_0(%arg0: i32, %arg1: i32) -> (i32, i32) {
    %c0_i32 = arith.constant 0 : i32
    %c0_i32_0 = arith.constant 0 : i32
    %c0_i32_1 = arith.constant 0 : i32
    return %c0_i32, %c0_i32_0 : i32, i32
  }
  func.func @transform_1(%arg0: i32, %arg1: i32) -> (i32, i32) {
    %c0_i32 = arith.constant 0 : i32
    %c0_i32_0 = arith.constant 0 : i32
    return %arg1, %c0_i32 : i32, i32
  }
  func.func @transform_2(%arg0: i32, %arg1: i32) -> (i32, i32) {
    %c0_i32 = arith.constant 0 : i32
    %c0_i32_0 = arith.constant 0 : i32
    %c0_i32_1 = arith.constant 0 : i32
    return %c0_i32, %c0_i32_0 : i32, i32
  }
}

</mosaic_0001>

<llo_original>
// kernel: tpu_custom_call.1
$region0: #{tpu_custom_call.1}
  #allocation0 [shape = 'u32[]', space=smem, size = 0x4, offset = 0x4, fixed_abs, tag = 'smem constant byte address 0x4 - core index']
  #allocation1 [shape = 'u32[144,128]{1,0:T(1,128)}', space=vmem, size = 0x12000, scoped, tag = 'internal scratch']
  #allocation2 [shape = 'f32[8,34]{1,0:T(8,128)}', space=vmem, size = 0x1000, scoped, tag = 'scratch operand']
  #allocation3 [shape = 'f32[8,34]{1,0:T(8,128)}', space=vmem, size = 0x1000, scoped, tag = 'scratch operand']
  %s0 = inlined_call_operand.vmem [shape: f32[8,32], index: 0, kind: input, shape index: {}]
  %s1 = inlined_call_operand.vmem [shape: f32[64,34], index: 1, kind: input, shape index: {}]
  %s2 = inlined_call_operand.hbm [shape: f32[8,32], index: 2, kind: output, shape index: {}]
  %s3 = sld [smem:[#allocation0]]
  $region53: #{tpu_custom_call.1} parent=0
    _
  %s5 = ssub.s32 1, %s3
  %s6 = scalar_select 0, %s5, %s3
  $region1: #{tpu_custom_call.1} parent=0
    #allocation4 [shape = 'u8[4096]{0}', space=vmem, size = 0x1000, scoped, tag = 'output window, operand 0, single buffered']
    #allocation5 [shape = 's32[2]{0}', space=sflag, size = 0x8, scoped, tag = 'scoped memory for tpu_custom_call.1']
    %7 = vsyncpa [#allocation5], 0
    loop: start=0, step=1, limit=12
    $region2: #{tpu_custom_call.1} parent=1 // loop_pre_header
      _
    $region3: #{tpu_custom_call.1} parent=1 // loop_header
      %s9 = sphi 0, %s13
      %p10 = scmp.ge.s32.totalorder %s9, 12
      %s16 = sphi 0, %s28
      %s17 = sphi 0, %s24
      %s18 = sphi 0, %s16
      %s19 = sphi 0, %s17
      %s20 = sphi 0, %s18
      %s21 = sphi 0, %s19
      %s29 = sphi 0, %s29
      %s31 = sphi 0, %s29
      %s32 = sphi 0, %s31
      %s46 = sphi 0, %s32
      %s52 = sphi 0, %s54
      %s55 = sphi 0, %s52
      %s56 = sphi 0, %s55
      %s72 = sphi 0, %s56
      %s76 = sphi 0, %s76
      %s78 = sphi 0, %s76
      %s79 = sphi 0, %s78
      %s93 = sphi 0, %s79
    $region4: #{tpu_custom_call.1} parent=1 // loop_header_branch
      %12 = sbr.rel (%p10) target = $region8
    $region5: #{tpu_custom_call.1} parent=1 // loop_body
      %s14 = ssub.s32 %s9, 1
      %s15 = ssub.s32 %s9, 2
      %s22 = sadd.s32 1, %s17
      %p23 = scmp.ge.s32.totalorder %s22, 1
      %s24 = scalar_select %p23, 0, %s22
      %s25 = sadd.s32 1, %s16
      %s26 = scalar_select %p23, %s25, %s16
      %p27 = scmp.ge.s32.totalorder %s26, 10
      %s28 = scalar_select %p27, 0, %s26
      %s30 = sadd.s32 %s29, 1
      %p33 = scmp.eq.s32.totalorder %s9, 9
      %p34 = scmp.ne.s32.totalorder %s29, %s31
      %p35 = scmp.eq.s32.totalorder %s9, 0
      %p36 = por %p34, %p35
      %p37 = scmp.ne.s32.totalorder %s29, %s31
      %p38 = scmp.eq.s32.totalorder %s14, 9
      %p39 = por %p37, %p38
      %p40 = scmp.ne.s32.totalorder %s31, %s32
      %p41 = scmp.eq.s32.totalorder %s14, 0
      %p42 = por %p40, %p41
      %p43 = scmp.ne.s32.totalorder %s31, %s32
      %p44 = scmp.eq.s32.totalorder %s15, 9
      %p45 = por %p43, %p44
      %p47 = scmp.ne.s32.totalorder %s32, %s46
      %p48 = scmp.eq.s32.totalorder %s15, 0
      %p49 = por %p47, %p48
      %s50 = ssub.s32 %s17, %s24
      %p51 = scmp.eq.s32.totalorder %s50, 0
      %s53 = sadd.s32 %s52, 1
      %s54 = scalar_select %p51, %s52, %s53
      %p57 = pneg %p51
      %p58 = scmp.eq.s32.totalorder %s9, 9
      %p59 = por %p57, %p58
      %p60 = scmp.ne.s32.totalorder %s52, %s55
      %p61 = scmp.eq.s32.totalorder %s9, 0
      %p62 = por %p60, %p61
      %p63 = scmp.ne.s32.totalorder %s52, %s55
      %p64 = scmp.eq.s32.totalorder %s14, 9
      %p65 = por %p63, %p64
      %p66 = scmp.ne.s32.totalorder %s55, %s56
      %p67 = scmp.eq.s32.totalorder %s14, 0
      %p68 = por %p66, %p67
      %p69 = scmp.ne.s32.totalorder %s55, %s56
      %p70 = scmp.eq.s32.totalorder %s15, 9
      %p71 = por %p69, %p70
      %p73 = scmp.ne.s32.totalorder %s56, %s72
      %p74 = scmp.eq.s32.totalorder %s15, 0
      %p75 = por %p73, %p74
      %s77 = sadd.s32 %s76, 1
      %p80 = scmp.eq.s32.totalorder %s9, 9
      %p81 = scmp.ne.s32.totalorder %s76, %s78
      %p82 = scmp.eq.s32.totalorder %s9, 0
      %p83 = por %p81, %p82
      %p84 = scmp.ne.s32.totalorder %s76, %s78
      %p85 = scmp.eq.s32.totalorder %s14, 9
      %p86 = por %p84, %p85
      %p87 = scmp.ne.s32.totalorder %s78, %s79
      %p88 = scmp.eq.s32.totalorder %s14, 0
      %p89 = por %p87, %p88
      %p90 = scmp.ne.s32.totalorder %s78, %s79
      %p91 = scmp.eq.s32.totalorder %s15, 9
      %p92 = por %p90, %p91
      %p94 = scmp.ne.s32.totalorder %s79, %s93
      %p95 = scmp.eq.s32.totalorder %s15, 0
      %p96 = por %p94, %p95
      %p97 = scmp.le.s32.totalorder 1, %s9
      %p98 = scmp.lt.s32.totalorder %s9, 11
      %p99 = pnand %p97, %p98
      %p100 = pneg %p99
      // Predicated region
      $region9: #{tpu_custom_call.1} parent=5 // pred_check
        _
      $region10: #{tpu_custom_call.1} parent=5 // pred_check_branch
        %102 = sbr.rel (%p99) target = $region12
      $region11: #{tpu_custom_call.1} parent=5 // pred_region
        %s103 = ssub.s32 %s9, 1
        // Predicated region
        $region13: #{tpu_custom_call.1} parent=11 // pred_check
          %p104 = pneg %p42
        $region14: #{tpu_custom_call.1} parent=11 // pred_check_branch
          %106 = sbr.rel (%p104) target = $region16
        $region15: #{tpu_custom_call.1} parent=11 // pred_region
          _
        $region16: #{tpu_custom_call.1} parent=11 // pred_fallthru
          _
        // Predicated region
        $region17: #{tpu_custom_call.1} parent=11 // pred_check
          %p107 = pneg %p68
        $region18: #{tpu_custom_call.1} parent=11 // pred_check_branch
          %109 = sbr.rel (%p107) target = $region20
        $region19: #{tpu_custom_call.1} parent=11 // pred_region
          %s110 = smul.u32 8, %s19
          %p111 = scmp.lt.s32.totalorder %s110, 7
          %s112 = scalar_select %p111, %s110, 7
          %s113 = smul.addr %s112, 8
          %s114 = scalar_lea.vmem %s1, %s113
          %s115 = smul.u32 8, %s19
        $region20: #{tpu_custom_call.1} parent=11 // pred_fallthru
          _
      $region12: #{tpu_custom_call.1} parent=5 // pred_fallthru
        _
      %p116 = scmp.lt.s32.totalorder %s9, 10
      // Predicated region
      $region21: #{tpu_custom_call.1} parent=5 // pred_check
        %p117 = pneg %p116
      $region22: #{tpu_custom_call.1} parent=5 // pred_check_branch
        %119 = sbr.rel (%p117) target = $region24
      $region23: #{tpu_custom_call.1} parent=5 // pred_region
        _
      $region24: #{tpu_custom_call.1} parent=5 // pred_fallthru
        _
      %p120 = scmp.le.s32.totalorder 1, %s9
      %p121 = scmp.lt.s32.totalorder %s9, 11
      %p122 = pnand %p120, %p121
      %p123 = pneg %p122
      // Predicated region
      $region25: #{tpu_custom_call.1} parent=5 // pred_check
        _
      $region26: #{tpu_custom_call.1} parent=5 // pred_check_branch
        %125 = sbr.rel (%p122) target = $region28
      $region27: #{tpu_custom_call.1} parent=5 // pred_region
        %s126 = ssub.s32 %s9, 1
        %p127 = pneg %p42
        %p128 = pneg %p39
        %s129 = smul.u32 8, %s19
        %p130 = scmp.lt.s32.totalorder %s129, 7
        %s131 = scalar_select %p130, %s129, 7
        %s132 = smul.addr %s131, 8
        %s133 = scalar_lea.vmem %s1, %s132
        %p134 = pneg %p68
        %p135 = pneg %p65
        %p136 = pneg %p89
        %p137 = pneg %p86
        %s138 = smul.u32 8, %s19
        %p139 = scmp.lt.s32.totalorder %s138, 7
        %s140 = scalar_select %p139, %s138, 7
        %s141 = smul.addr %s140, 8
        %s142 = scalar_lea.vmem %s1, %s141
        %s143 = smul.u32 8, %s19
        %p144 = scmp.eq.s32.totalorder %s18, 0
        %p145 = scmp.eq.s32.totalorder %s19, 0
        %p146 = pnand %p144, %p145
        %p147 = pneg %p146
        // Predicated region
        $region29: #{tpu_custom_call.1} parent=27 // pred_check
          _
        $region30: #{tpu_custom_call.1} parent=27 // pred_check_branch
          %149 = sbr.rel (%p146) target = $region32
        $region31: #{tpu_custom_call.1} parent=27 // pred_region
          %v150 = vld [vmem:[%s0] sm:$0xff]
          %vm151 = vcmask 261120
          %152 = vst.msk [vmem:[#allocation4] sm:$0xff] %vm151, %v150
        $region32: #{tpu_custom_call.1} parent=27 // pred_fallthru
          _
        // Predicated region
        $region33: #{tpu_custom_call.1} parent=27 // pred_check
          %p153 = pneg %p145
        $region34: #{tpu_custom_call.1} parent=27 // pred_check_branch
          %155 = sbr.rel (%p153) target = $region36
        $region35: #{tpu_custom_call.1} parent=27 // pred_region
          %v156 = vld [vmem:[#allocation4] sm:$0xff]
          %v157 = vmul.f32 %v156, %v156
          %vm158 = vcmask 261120
          %v159 = vsel %vm158, %v157, 0.0
          %160 = vadd.xlane.f32.xlu0 %v159
          %v161 = vpop.xlane.xlu0 %160
          %v162 = vmax.f32 %v161, 1e-16
          %v163 = vrsqrt.pop %v162
          %vm164 = vcmask 277504
          %165 = vst.msk [vmem:[#allocation2] sm:$0xff] %vm164, 0.0
          %v166 = vmul.f32 %v156, %v163
          %167 = vst.msk [vmem:[#allocation2] sm:$0xff] %vm158, %v166
          %168 = vst.msk [vmem:[#allocation3] sm:$0xff] %vm164, 0.0
        $region36: #{tpu_custom_call.1} parent=27 // pred_fallthru
          _
        %v169 = vld [vmem:[%s142] sm:$0xff]
        %v170 = vld [vmem:[%s142 + $0x8] sm:$0xff]
        %v171 = vld [vmem:[%s142 + $0x10] sm:$0xff]
        %v172 = vld [vmem:[%s142 + $0x18] sm:$0xff]
        %v173 = vld [vmem:[%s142 + $0x20] sm:$0xff]
        %v174 = vld [vmem:[%s142 + $0x28] sm:$0xff]
        %v175 = vld [vmem:[%s142 + $0x30] sm:$0xff]
        %v176 = vld [vmem:[%s142 + $0x38] sm:$0xff]
        %v177 = vld [vmem:[#allocation2] sm:$0xff]
        %vm178 = vcmask 277504
        %v180 = vsel %vm178, %v169, 0
        %v183 = vsel %vm178, %v170, 0
        %v186 = vsel %vm178, %v171, 0
        %v189 = vsel %vm178, %v172, 0
        %v192 = vsel %vm178, %v173, 0
        %v195 = vsel %vm178, %v174, 0
        %v198 = vsel %vm178, %v175, 0
        %v201 = vsel %vm178, %v176, 0
        %v204 = vsel %vm178, %v177, 0
        %206 = vmatprep.subr.mxu0 0.0
        %207 = vmatpush1.xpose.msra.mxu0 %v204
        %208 = vmatprep.subr.mxu0 0.0
        %209 = vmatpush1.xpose.msra.mxu0 0.0
        %210 = vmatprep.subr.mxu0 0.0
        %211 = vmatpush1.xpose.msra.mxu0 0.0
        %212 = vmatprep.subr.mxu0 0.0
        %213 = vmatpush1.xpose.msra.mxu0 0.0
        %214 = vmatprep.subr.mxu0 0.0
        %215 = vmatpush1.xpose.msra.mxu0 0.0
        %216 = vmatprep.subr.mxu0 0.0
        %217 = vmatpush1.xpose.msra.mxu0 0.0
        %218 = vmatprep.subr.mxu0 0.0
        %219 = vmatpush1.xpose.msra.mxu0 0.0
        %220 = vmatprep.subr.mxu0 0.0
        %221 = vmatpush1.xpose.msra.mxu0 0.0
        %222 = vmatprep.subr.mxu0 0.0
        %223 = vmatpush1.xpose.msra.mxu0 0.0
        %224 = vmatprep.subr.mxu0 0.0
        %225 = vmatpush1.xpose.msra.mxu0 0.0
        %226 = vmatprep.subr.mxu0 0.0
        %227 = vmatpush1.xpose.msra.mxu0 0.0
        %228 = vmatprep.subr.mxu0 0.0
        %229 = vmatpush1.xpose.msra.mxu0 0.0
        %230 = vmatprep.subr.mxu0 0.0
        %231 = vmatpush1.xpose.msra.mxu0 0.0
        %232 = vmatprep.subr.mxu0 0.0
        %233 = vmatpush1.xpose.msra.mxu0 0.0
        %234 = vmatprep.subr.mxu0 0.0
        %235 = vmatpush1.xpose.msra.mxu0 0.0
        %236 = vmatprep.subr.mxu0 0.0
        %237 = vmatpush1.xpose.msra.mxu0 0.0
        %238 = vmatprep.subr.mxu0 0.0
        %239 = vmatpush1.xpose.msra.mxu0 0.0
        %240 = vmatprep.subr.mxu0 0.0
        %241 = vmatpush1.xpose.msra.mxu0 0.0
        %242 = vmatprep.subr.mxu0 0.0
        %243 = vmatpush1.xpose.msra.mxu0 0.0
        %244 = vmatprep.subr.mxu0 0.0
        %245 = vmatpush1.xpose.msra.mxu0 0.0
        %246 = vmatprep.subr.mxu0 0.0
        %247 = vmatpush1.xpose.msra.mxu0 0.0
        %248 = vmatprep.subr.mxu0 0.0
        %249 = vmatpush1.xpose.msra.mxu0 0.0
        %250 = vmatprep.subr.mxu0 0.0
        %251 = vmatpush1.xpose.msra.mxu0 0.0
        %252 = vmatprep.subr.mxu0 0.0
        %253 = vmatpush1.xpose.msra.mxu0 0.0
        %254 = vmatprep.subr.mxu0 0.0
        %255 = vmatpush1.xpose.msra.mxu0 0.0
        %256 = vmatprep.subr.mxu0 0.0
        %257 = vmatpush1.xpose.msra.mxu0 0.0
        %258 = vmatprep.subr.mxu0 0.0
        %259 = vmatpush1.xpose.msra.mxu0 0.0
        %260 = vmatprep.subr.mxu0 0.0
        %261 = vmatpush1.xpose.msra.mxu0 0.0
        %262 = vmatprep.subr.mxu0 0.0
        %263 = vmatpush1.xpose.msra.mxu0 0.0
        %264 = vmatprep.subr.mxu0 0.0
        %265 = vmatpush1.xpose.msra.mxu0 0.0
        %266 = vmatprep.subr.mxu0 0.0
        %267 = vmatpush1.xpose.msra.mxu0 0.0
        %268 = vmatprep.subr.mxu0 0.0
        %269 = vmatpush1.xpose.msra.mxu0 0.0
        %270 = vmatprep.mubr.f32.mxu0 0.0
        %271 = vmatmul.mubr.f32.gmra.mrb[0].mxu0 %v180
        %v272 = vpop.f32.mrb[0].mxu0
        %v273 = vadd.f32 0.0, %v272
        %v274 = vpop.f32.mrb[0].mxu0
        %275 = vmatprep.mubr.f32.mxu0 0.0
        %276 = vmatmul.mubr.f32.gmra.mrb[0].mxu0 %v183
        %v277 = vpop.f32.mrb[0].mxu0
        %v278 = vadd.f32 0.0, %v277
        %v279 = vpop.f32.mrb[0].mxu0
        %280 = vmatprep.mubr.f32.mxu0 0.0
        %281 = vmatmul.mubr.f32.gmra.mrb[0].mxu0 %v186
        %v282 = vpop.f32.mrb[0].mxu0
        %v283 = vadd.f32 0.0, %v282
        %v284 = vpop.f32.mrb[0].mxu0
        %285 = vmatprep.mubr.f32.mxu0 0.0
        %286 = vmatmul.mubr.f32.gmra.mrb[0].mxu0 %v189
        %v287 = vpop.f32.mrb[0].mxu0
        %v288 = vadd.f32 0.0, %v287
        %v289 = vpop.f32.mrb[0].mxu0
        %290 = vmatprep.mubr.f32.mxu0 0.0
        %291 = vmatmul.mubr.f32.gmra.mrb[0].mxu0 %v192
        %v292 = vpop.f32.mrb[0].mxu0
        %v293 = vadd.f32 0.0, %v292
        %v294 = vpop.f32.mrb[0].mxu0
        %295 = vmatprep.mubr.f32.mxu0 0.0
        %296 = vmatmul.mubr.f32.gmra.mrb[0].mxu0 %v195
        %v297 = vpop.f32.mrb[0].mxu0
        %v298 = vadd.f32 0.0, %v297
        %v299 = vpop.f32.mrb[0].mxu0
        %300 = vmatprep.mubr.f32.mxu0 0.0
        %301 = vmatmul.mubr.f32.gmra.mrb[0].mxu0 %v198
        %v302 = vpop.f32.mrb[0].mxu0
        %v303 = vadd.f32 0.0, %v302
        %v304 = vpop.f32.mrb[0].mxu0
        %305 = vmatprep.mubr.f32.mxu0 0.0
        %306 = vmatmul.mubr.f32.gmra.mrb[0].mxu0 %v201
        %v307 = vpop.f32.mrb[0].mxu0
        %v308 = vadd.f32 0.0, %v307
        %v309 = vpop.f32.mrb[0].mxu0
        %310 = vdwg.mxu0
        %v311 = vmul.f32 %v273, 2.0
        %v312 = vmul.f32 %v278, 2.0
        %v313 = vmul.f32 %v283, 2.0
        %v314 = vmul.f32 %v288, 2.0
        %v315 = vmul.f32 %v293, 2.0
        %v316 = vmul.f32 %v298, 2.0
        %v317 = vmul.f32 %v303, 2.0
        %v318 = vmul.f32 %v308, 2.0
        %v319 = vmul.f32 %v311, 1.442695
        %v320 = vpow.pop %v319
        %v321 = vmul.f32 %v312, 1.442695
        %v322 = vpow.pop %v321
        %v323 = vmul.f32 %v313, 1.442695
        %v324 = vpow.pop %v323
        %v325 = vmul.f32 %v314, 1.442695
        %v326 = vpow.pop %v325
        %v327 = vmul.f32 %v315, 1.442695
        %v328 = vpow.pop %v327
        %v329 = vmul.f32 %v316, 1.442695
        %v330 = vpow.pop %v329
        %v331 = vmul.f32 %v317, 1.442695
        %v332 = vpow.pop %v331
        %v333 = vmul.f32 %v318, 1.442695
        %v334 = vpow.pop %v333
        %vm335 = vcmask 64512
        %v336 = vsel %vm335, %v320, 0.0
        %337 = vadd.xlane.f32.xlu0 %v336
        %v338 = vpop.xlane.xlu0 %337
        %v339 = vsel %vm335, %v322, 0.0
        %340 = vadd.xlane.f32.xlu0 %v339
        %v341 = vpop.xlane.xlu0 %340
        %v342 = vsel %vm335, %v324, 0.0
        %343 = vadd.xlane.f32.xlu0 %v342
        %v344 = vpop.xlane.xlu0 %343
        %v345 = vsel %vm335, %v326, 0.0
        %346 = vadd.xlane.f32.xlu0 %v345
        %v347 = vpop.xlane.xlu0 %346
        %v348 = vsel %vm335, %v328, 0.0
        %349 = vadd.xlane.f32.xlu0 %v348
        %v350 = vpop.xlane.xlu0 %349
        %v351 = vsel %vm335, %v330, 0.0
        %352 = vadd.xlane.f32.xlu0 %v351
        %v353 = vpop.xlane.xlu0 %352
        %v354 = vsel %vm335, %v332, 0.0
        %355 = vadd.xlane.f32.xlu0 %v354
        %v356 = vpop.xlane.xlu0 %355
        %v357 = vsel %vm335, %v334, 0.0
        %358 = vadd.xlane.f32.xlu0 %v357
        %v359 = vpop.xlane.xlu0 %358
        %v360 = vrcp.pop %v338
        %v361 = vrcp.pop %v341
        %v362 = vrcp.pop %v344
        %v363 = vrcp.pop %v347
        %v364 = vrcp.pop %v350
        %v365 = vrcp.pop %v353
        %v366 = vrcp.pop %v356
        %v367 = vrcp.pop %v359
        %v368 = vmul.f32 %v320, %v360
        %v369 = vmul.f32 %v322, %v361
        %v370 = vmul.f32 %v324, %v362
        %v371 = vmul.f32 %v326, %v363
        %v372 = vmul.f32 %v328, %v364
        %v373 = vmul.f32 %v330, %v365
        %v374 = vmul.f32 %v332, %v366
        %v375 = vmul.f32 %v334, %v367
        %376 = vset.pattern.permute.xlu0 33
        %377 = vperm.xlu0 %376, %v169
        %v378 = vpop.permute.xlu0 %377
        %380 = vset.pattern.permute.xlu0 33
        %381 = vperm.xlu0 %380, %v170
        %v382 = vpop.permute.xlu0 %381
        %384 = vset.pattern.permute.xlu0 33
        %385 = vperm.xlu0 %384, %v171
        %v386 = vpop.permute.xlu0 %385
        %388 = vset.pattern.permute.xlu0 33
        %389 = vperm.xlu0 %388, %v172
        %v390 = vpop.permute.xlu0 %389
        %392 = vset.pattern.permute.xlu0 33
        %393 = vperm.xlu0 %392, %v173
        %v394 = vpop.permute.xlu0 %393
        %396 = vset.pattern.permute.xlu0 33
        %397 = vperm.xlu0 %396, %v174
        %v398 = vpop.permute.xlu0 %397
        %400 = vset.pattern.permute.xlu0 33
        %401 = vperm.xlu0 %400, %v175
        %v402 = vpop.permute.xlu0 %401
        %404 = vset.pattern.permute.xlu0 33
        %405 = vperm.xlu0 %404, %v176
        %v406 = vpop.permute.xlu0 %405
        %v408 = vmul.f32 %v368, %v378
        %v409 = vmul.f32 %v369, %v382
        %v410 = vmul.f32 %v370, %v386
        %v411 = vmul.f32 %v371, %v390
        %v412 = vmul.f32 %v372, %v394
        %v413 = vmul.f32 %v373, %v398
        %v414 = vmul.f32 %v374, %v402
        %v415 = vmul.f32 %v375, %v406
        %v416 = vld [vmem:[#allocation3] sm:$0xff]
        %417 = vxpose.xlu0.b32.start [1/16] %v408, 128
        %418 = vxpose.xlu0.b32.cont [2/16] %v409, 128
        %419 = vxpose.xlu0.b32.cont [3/16] %v410, 128
        %420 = vxpose.xlu0.b32.cont [4/16] %v411, 128
        %421 = vxpose.xlu0.b32.cont [5/16] %v412, 128
        %422 = vxpose.xlu0.b32.cont [6/16] %v413, 128
        %423 = vxpose.xlu0.b32.cont [7/16] %v414, 128
        %424 = vxpose.xlu0.b32.cont [8/16] %v415, 128
        %425 = vxpose.xlu0.b32.cont [9/16] 0.0, 128
        %426 = vxpose.xlu0.b32.cont [10/16] 0.0, 128
        %427 = vxpose.xlu0.b32.cont [11/16] 0.0, 128
        %428 = vxpose.xlu0.b32.cont [12/16] 0.0, 128
        %429 = vxpose.xlu0.b32.cont [13/16] 0.0, 128
        %430 = vxpose.xlu0.b32.cont [14/16] 0.0, 128
        %431 = vxpose.xlu0.b32.cont [15/16] 0.0, 128
        %432 = vxpose.xlu0.b32.end [16/16] 0.0, 128
        %v433 = vpop.trf.xlu0
        %v434 = vpop.trf.xlu0
        %v435 = vpop.trf.xlu0
        %v436 = vpop.trf.xlu0
        %v437 = vpop.trf.xlu0
        %v438 = vpop.trf.xlu0
        %v439 = vpop.trf.xlu0
        %v440 = vpop.trf.xlu0
        %v441 = vpop.trf.xlu0
        %v442 = vpop.trf.xlu0
        %v443 = vpop.trf.xlu0
        %v444 = vpop.trf.xlu0
        %v445 = vpop.trf.xlu0
        %v446 = vpop.trf.xlu0
        %v447 = vpop.trf.xlu0
        %v448 = vpop.trf.xlu0
        %vm449 = vcmask 523264
        %v451 = vsel %vm449, %v433, 0
        %453 = vmatprep.subr.mxu0 0.0
        %454 = vmatpush1.msra.mxu0 %v169
        %455 = vmatprep.subr.mxu0 0.0
        %456 = vmatpush1.msra.mxu0 %v170
        %457 = vmatprep.subr.mxu0 0.0
        %458 = vmatpush1.msra.mxu0 %v171
        %459 = vmatprep.subr.mxu0 0.0
        %460 = vmatpush1.msra.mxu0 %v172
        %461 = vmatprep.subr.mxu0 0.0
        %462 = vmatpush1.msra.mxu0 %v173
        %463 = vmatprep.subr.mxu0 0.0
        %464 = vmatpush1.msra.mxu0 %v174
        %465 = vmatprep.subr.mxu0 0.0
        %466 = vmatpush1.msra.mxu0 %v175
        %467 = vmatprep.subr.mxu0 0.0
        %468 = vmatpush1.msra.mxu0 %v176
        %469 = vmatprep.subr.mxu0 0.0
        %470 = vmatpush1.msra.mxu0 0.0
        %471 = vmatprep.subr.mxu0 0.0
        %472 = vmatpush1.msra.mxu0 0.0
        %473 = vmatprep.subr.mxu0 0.0
        %474 = vmatpush1.msra.mxu0 0.0
        %475 = vmatprep.subr.mxu0 0.0
        %476 = vmatpush1.msra.mxu0 0.0
        %477 = vmatprep.subr.mxu0 0.0
        %478 = vmatpush1.msra.mxu0 0.0
        %479 = vmatprep.subr.mxu0 0.0
        %480 = vmatpush1.msra.mxu0 0.0
        %481 = vmatprep.subr.mxu0 0.0
        %482 = vmatpush1.msra.mxu0 0.0
        %483 = vmatprep.subr.mxu0 0.0
        %484 = vmatpush1.msra.mxu0 0.0
        %485 = vmatprep.subr.mxu0 0.0
        %486 = vmatpush1.msra.mxu0 0.0
        %487 = vmatprep.subr.mxu0 0.0
        %488 = vmatpush1.msra.mxu0 0.0
        %489 = vmatprep.subr.mxu0 0.0
        %490 = vmatpush1.msra.mxu0 0.0
        %491 = vmatprep.subr.mxu0 0.0
        %492 = vmatpush1.msra.mxu0 0.0
        %493 = vmatprep.subr.mxu0 0.0
        %494 = vmatpush1.msra.mxu0 0.0
        %495 = vmatprep.subr.mxu0 0.0
        %496 = vmatpush1.msra.mxu0 0.0
        %497 = vmatprep.subr.mxu0 0.0
        %498 = vmatpush1.msra.mxu0 0.0
        %499 = vmatprep.subr.mxu0 0.0
        %500 = vmatpush1.msra.mxu0 0.0
        %501 = vmatprep.subr.mxu0 0.0
        %502 = vmatpush1.msra.mxu0 0.0
        %503 = vmatprep.subr.mxu0 0.0
        %504 = vmatpush1.msra.mxu0 0.0
        %505 = vmatprep.subr.mxu0 0.0
        %506 = vmatpush1.msra.mxu0 0.0
        %507 = vmatprep.subr.mxu0 0.0
        %508 = vmatpush1.msra.mxu0 0.0
        %509 = vmatprep.subr.mxu0 0.0
        %510 = vmatpush1.msra.mxu0 0.0
        %511 = vmatprep.subr.mxu0 0.0
        %512 = vmatpush1.msra.mxu0 0.0
        %513 = vmatprep.subr.mxu0 0.0
        %514 = vmatpush1.msra.mxu0 0.0
        %515 = vmatprep.subr.mxu0 0.0
        %516 = vmatpush1.msra.mxu0 0.0
        %517 = vmatprep.mubr.f32.mxu0 0.0
        %518 = vmatmul.mubr.f32.gmra.mrb[0].mxu0 %v451
        %v519 = vpop.f32.mrb[0].mxu0
        %v520 = vadd.f32 0.0, %v519
        %v521 = vpop.f32.mrb[0].mxu0
        %522 = vdwg.mxu0
        %v523 = vadd.f32 %v416, %v520
        %524 = vst.msk [vmem:[#allocation3] sm:$0xff] %vm178, %v523
        // Predicated region
        $region37: #{tpu_custom_call.1} parent=27 // pred_check
          %p525 = pneg %p145
        $region38: #{tpu_custom_call.1} parent=27 // pred_check_branch
          %527 = sbr.rel (%p525) target = $region40
        $region39: #{tpu_custom_call.1} parent=27 // pred_region
          %v528 = vld [vmem:[#allocation3] sm:$0xff]
          %530 = vset.pattern.permute.xlu0 32
          %531 = vperm.xlu0 %530, %v528
          %v532 = vpop.permute.xlu0 %531
          %v534 = vrcp.pop %v532
          %v535 = vmul.f32 %v528, %v534
          %vm536 = vcmask 261120
          %537 = vst.msk [vmem:[#allocation4] sm:$0xff] %vm536, %v535
        $region40: #{tpu_custom_call.1} parent=27 // pred_fallthru
          _
        // Predicated region
        $region41: #{tpu_custom_call.1} parent=27 // pred_check
          %p538 = pneg %p86
        $region42: #{tpu_custom_call.1} parent=27 // pred_check_branch
          %540 = sbr.rel (%p538) target = $region44
        $region43: #{tpu_custom_call.1} parent=27 // pred_region
          %s542 = ssub.s32 128, 128
          %543 = vsyncadd [#allocation5], %s542
          %s545 = sshll.u32 [#allocation4], 4
          %s546 = int_to_ptr.vmem [resolvable:$true] %s545
          %548 = dma.vmem_to_hbm [thread:$0]  %s546, 128, %s2, [#allocation5]
        $region44: #{tpu_custom_call.1} parent=27 // pred_fallthru
          _
        // Predicated region
        $region45: #{tpu_custom_call.1} parent=27 // pred_check
          %p549 = pneg %p86
        $region46: #{tpu_custom_call.1} parent=27 // pred_check_branch
          %551 = sbr.rel (%p549) target = $region48
        $region47: #{tpu_custom_call.1} parent=27 // pred_region
          %552 = dma.done [#allocation5], 128
        $region48: #{tpu_custom_call.1} parent=27 // pred_fallthru
          _
      $region28: #{tpu_custom_call.1} parent=5 // pred_fallthru
        _
      %p553 = scmp.le.s32.totalorder 2, %s9
      // Predicated region
      $region49: #{tpu_custom_call.1} parent=5 // pred_check
        %p554 = pneg %p553
      $region50: #{tpu_custom_call.1} parent=5 // pred_check_branch
        %556 = sbr.rel (%p554) target = $region52
      $region51: #{tpu_custom_call.1} parent=5 // pred_region
        %s557 = ssub.s32 %s9, 2
      $region52: #{tpu_custom_call.1} parent=5 // pred_fallthru
        _
    $region6: #{tpu_custom_call.1} parent=1 // loop_footer
      %s13 = sadd.s32 1, %s9
    $region7: #{tpu_custom_call.1} parent=1 // loop_footer_branch
      %8 = sbr.rel target = $region3
    $region8: #{tpu_custom_call.1} parent=1 // loop_exit
      _
    %558 = vsyncpa [#allocation5], 1
    %s559 = scalar_lea.sflag [#allocation5], 1
    %560 = vsyncpa %s559, 1

</llo_original>
